<compile_context>
chip_gen: v5e
topology: v5e:2x2
jax: 0.10.0
libtpu: 0.0.40
codegen_flags: <defaults>
</compile_context>

<pallas_src>
import functools

import jax
import jax.numpy as jnp
from jax.experimental import pallas as pl
from jax.experimental.pallas import tpu as pltpu

_NEG_BIG = -1e30  # finite "-inf" bias for padded vocab columns (avoids inf/nan math)


def _round_up(x, m):
    return pl.cdiv(x, m) * m


def _vmem_cap_bytes():
    # Generation-aware physical VMEM (v5e/v6e: 128 MiB, v7x: 64 MiB per core).
    try:
        return int(pltpu.get_tpu_info().vmem_capacity_bytes)
    except Exception:
        return 64 * 1024 * 1024  # conservative (v7x per-core) fallback


def _logits_lse_kernel(x_ref, w_ref, b_ref, logits_ref, lse_ref, m_sc, l_sc):
    j = pl.program_id(1)
    nj = pl.num_programs(1)

    @pl.when(j == 0)
    def _():
        m_sc[...] = jnp.full_like(m_sc, -jnp.inf)
        l_sc[...] = jnp.zeros_like(l_sc)

    # Bias is one VMEM-resident (nj, tn) block; pick this vocab tile's row (no DMA).
    bias = b_ref[pl.ds(j, 1), :]                       # (1, tn) f32

    # MXU matmul: bf16 operands, f32 accumulation; softmax math stays in f32.
    logits = jnp.dot(x_ref[...], w_ref[...],
                     preferred_element_type=jnp.float32) + bias

    # Online logsumexp across vocab tiles (XLU reductions + EUP exp, off the MXU path).
    m_prev = m_sc[...]
    m_new = jnp.maximum(m_prev, jnp.max(logits, axis=-1, keepdims=True))
    l_sc[...] = (l_sc[...] * jnp.exp(m_prev - m_new)
                 + jnp.sum(jnp.exp(logits - m_new), axis=-1, keepdims=True))
    m_sc[...] = m_new

    # Raw logits tile -> HBM (lane-dense (tm, tn) store; nothing vocab-wide in VMEM).
    logits_ref[...] = logits.astype(logits_ref.dtype)

    # Last vocab tile: emit the per-row logsumexp.
    @pl.when(j == nj - 1)
    def _():
        lse_ref[...] = m_sc[...] + jnp.log(l_sc[...])


def _normalize_kernel(logits_ref, lse_ref, o_ref):
    # Streaming elementwise normalization: log_probs = logits - lse.
    o_ref[...] = (logits_ref[...].astype(jnp.float32) - lse_ref[...]).astype(o_ref.dtype)


@functools.partial(jax.jit, static_argnames=("tm", "tn", "out_dtype", "logits_dtype"))
def generator_forward(x, w, b, *, tm=256, tn=None,
                      out_dtype=jnp.float32, logits_dtype=jnp.float32):
    """x: (batch, seq, d_model); w: (d_model, vocab); b: (vocab,) -> (batch, seq, vocab) log-probs."""
    batch, seq, d_model = x.shape
    vocab = w.shape[1]
    n_rows = batch * seq

    cap = _vmem_cap_bytes()
    budget = (cap * 5) // 8                      # leave headroom for compiler scratch

    # tn default: 1024 on 128-MiB parts (v5e/v6e), 512 on 64-MiB parts (v7x).
    if tn is None:
        tn = 1024 if cap >= (96 << 20) else 512

    # Row tile multiple of 8, vocab tile multiple of 128; clamp so tiny problems don't
    # over-pad, then shrink tiles until the pass-1 working set fits the VMEM budget
    # (tiles derived from the cap instead of just clamping vmem_limit_bytes).
    tm = max(8, min(int(tm), _round_up(n_rows, 8)))
    tn = max(128, min(int(tn), _round_up(vocab, 128)))
    stash_bytes = jnp.dtype(logits_dtype).itemsize

    def pass1_bytes(tm_, tn_):
        return (2 * tm_ * d_model * 2                 # x tile (bf16), double-buffered
                + 2 * d_model * tn_ * 2               # weight tile (bf16), double-buffered
                + 2 * _round_up(vocab, tn_) * 4       # bias, resident
                + 2 * tm_ * tn_ * stash_bytes         # raw-logits out tile, double-buffered
                + 4 * tm_ * 4                         # lse out tile
                + 2 * tm_ * 4)                        # running max / sum scratch

    while pass1_bytes(tm, tn) > budget and tn > 128:
        tn = max(128, ((tn // 2) // 128) * 128)
    while pass1_bytes(tm, tn) > budget and tm > 8:
        tm = max(8, ((tm // 2) // 8) * 8)

    rows_p = _round_up(n_rows, tm)
    vocab_p = _round_up(vocab, tn)      # invariant: vocab_p - vocab < tn
    nj = vocab_p // tn

    # Operand prep: bf16 matmul operands (f32 MXU accumulation in-kernel). Weight/bias
    # padding is a one-time, weight-sized cost; padded bias columns get a finite -inf
    # so they never affect the max / logsumexp.
    x2d = x.reshape(n_rows, d_model)
    if rows_p != n_rows:
        x2d = jnp.pad(x2d, ((0, rows_p - n_rows), (0, 0)))
    x_bf = x2d.astype(jnp.bfloat16)
    w_p = w if vocab_p == vocab else jnp.pad(w, ((0, 0), (0, vocab_p - vocab)))
    w_bf = w_p.astype(jnp.bfloat16)
    b_p = b.astype(jnp.float32)
    if vocab_p != vocab:
        b_p = jnp.pad(b_p, (0, vocab_p - vocab), constant_values=_NEG_BIG)
    b_tiles = b_p.reshape(nj, tn)

    vmem1 = int(min(max(2 * pass1_bytes(tm, tn), 32 << 20), (cap * 7) // 8))

    # ---- Pass 1: raw logits tiles + per-row logsumexp -------------------------------
    logits_pad, lse = pl.pallas_call(
        _logits_lse_kernel,
        out_shape=(jax.ShapeDtypeStruct((rows_p, vocab_p), logits_dtype),
                   jax.ShapeDtypeStruct((rows_p, 1), jnp.float32)),
        grid_spec=pltpu.PrefetchScalarGridSpec(
            num_scalar_prefetch=0,
            grid=(rows_p // tm, nj),
            in_specs=[
                pl.BlockSpec((tm, d_model), lambda i, j: (i, 0)),   # row tile (resident over j)
                pl.BlockSpec((d_model, tn), lambda i, j: (0, j)),   # weight vocab tile
                pl.BlockSpec((nj, tn), lambda i, j: (0, 0)),        # bias (fully resident)
            ],
            out_specs=[
                pl.BlockSpec((tm, tn), lambda i, j: (i, j)),        # raw logits tile
                pl.BlockSpec((tm, 1), lambda i, j: (i, 0)),         # per-row logsumexp
            ],
            scratch_shapes=[pltpu.VMEM((tm, 1), jnp.float32),       # running max
                            pltpu.VMEM((tm, 1), jnp.float32)],      # running sum-exp
        ),
        compiler_params=pltpu.CompilerParams(
            dimension_semantics=("parallel", "arbitrary"),
            vmem_limit_bytes=vmem1,
        ),
    )(x_bf, w_bf, b_tiles)

    # ---- Pass 2: streaming normalize, emits the exact (n_rows, vocab) output --------
    out_bytes = jnp.dtype(out_dtype).itemsize
    vmem2 = int(min(max(2 * (2 * tm * tn * (stash_bytes + out_bytes) + 4 * tm * 4),
                        32 << 20), (cap * 7) // 8))

    out2d = pl.pallas_call(
        _normalize_kernel,
        out_shape=jax.ShapeDtypeStruct((n_rows, vocab), out_dtype),
        grid_spec=pltpu.PrefetchScalarGridSpec(
            num_scalar_prefetch=0,
            grid=(pl.cdiv(n_rows, tm), pl.cdiv(vocab, tn)),
            in_specs=[
                pl.BlockSpec((tm, tn), lambda i, j: (i, j)),        # raw logits tile
                pl.BlockSpec((tm, 1), lambda i, j: (i, 0)),         # per-row lse
            ],
            out_specs=pl.BlockSpec((tm, tn), lambda i, j: (i, j)),  # ragged tail masked by Pallas
        ),
        compiler_params=pltpu.CompilerParams(
            dimension_semantics=("parallel", "parallel"),
            vmem_limit_bytes=vmem2,
        ),
    )(logits_pad, lse)

    return out2d.reshape(batch, seq, vocab)


if __name__ == "__main__":
    # Small shapes: batch=2, seq=8, d_model=64, vocab=1000
    # (vocab not a multiple of 128 and rows not a multiple of the default tm ->
    #  exercises padding, ragged output tiles, and the online logsumexp).
    batch, seq, d_model, vocab = 2, 8, 64, 1000

    key = jax.random.PRNGKey(0)
    kx, kw, kb = jax.random.split(key, 3)

    x = jax.random.normal(kx, (batch, seq, d_model), dtype=jnp.float32)
    # nn.Linear default init ~ U(-1/sqrt(d_model), 1/sqrt(d_model)); deterministic here.
    bound = 1.0 / (d_model ** 0.5)
    w = jax.random.uniform(kw, (d_model, vocab), dtype=jnp.float32,
                           minval=-bound, maxval=bound)
    b = jax.random.uniform(kb, (vocab,), dtype=jnp.float32,
                           minval=-bound, maxval=bound)

    out = generator_forward(x, w, b)
    jax.block_until_ready(out)
    assert out.shape == (batch, seq, vocab)

    # Reference using the same bf16-operand / f32-accumulation matmul as the kernel.
    x2 = x.reshape(-1, d_model).astype(jnp.bfloat16)
    logits_ref = jnp.dot(x2, w.astype(jnp.bfloat16),
                         preferred_element_type=jnp.float32) + b
    ref = jax.nn.log_softmax(logits_ref, axis=-1).reshape(batch, seq, vocab)
    assert jnp.allclose(out, ref, atol=2e-3, rtol=2e-3), \
        float(jnp.max(jnp.abs(out - ref)))

    # Small tiles: exercises multi-tile online logsumexp, row tiling, ragged vocab tail.
    out2 = generator_forward(x, w, b, tm=8, tn=128)
    jax.block_until_ready(out2)
    assert jnp.allclose(out2, ref, atol=2e-3, rtol=2e-3), \
        float(jnp.max(jnp.abs(out2 - ref)))

    # Looser sanity check against the pure-f32 reference (bf16 operand rounding only).
    ref32 = jax.nn.log_softmax(x @ w + b, axis=-1)
    assert jnp.allclose(out, ref32, atol=5e-2, rtol=5e-2)

    print("KERNEL_OK")
</pallas_src>

<mosaic_0001>
module attributes {stable_mosaic.version = 11 : i64} {
  func.func @_normalize_kernel(%arg0: i32, %arg1: i32, %arg2: memref<16x512xf32, #tpu.memory_space<vmem>>, %arg3: memref<16x1xf32, #tpu.memory_space<vmem>>, %arg4: memref<16x512xf32, #tpu.memory_space<vmem>>) attributes {dimension_semantics = [#tpu.dimension_semantics<parallel>, #tpu.dimension_semantics<parallel>], iteration_bounds = array<i64: 1, 2>, scalar_prefetch = 0 : i64, scratch_operands = 0 : i64, tpu.core_type = #tpu.core_type<tc>, window_params = [{transform_indices = @transform_0, window_bounds = array<i64: 16, 512>}, {transform_indices = @transform_1, window_bounds = array<i64: 16, 1>}, {transform_indices = @transform_2, window_bounds = array<i64: 16, 512>}]} {
    %c0 = arith.constant 0 : index
    %c0_0 = arith.constant 0 : index
    %0 = vector.load %arg2[%c0, %c0_0] : memref<16x512xf32, #tpu.memory_space<vmem>>, vector<16x512xf32>
    %c0_1 = arith.constant 0 : index
    %c0_2 = arith.constant 0 : index
    %1 = vector.load %arg3[%c0_1, %c0_2] : memref<16x1xf32, #tpu.memory_space<vmem>>, vector<16x1xf32>
    %2 = vector.broadcast %1 : vector<16x1xf32> to vector<16x512xf32>
    %3 = arith.subf %0, %2 : vector<16x512xf32>
    %c0_3 = arith.constant 0 : index
    %c0_4 = arith.constant 0 : index
    %4 = vector.load %arg4[%c0_3, %c0_4] : memref<16x512xf32, #tpu.memory_space<vmem>>, vector<16x512xf32>
    tpu.vector_store %arg4[%c0_3, %c0_4], %3 {strides = array<i32>} : memref<16x512xf32, #tpu.memory_space<vmem>>, vector<16x512xf32>,
    return
  }
  func.func @transform_0(%arg0: i32, %arg1: i32) -> (i32, i32) {
    %c0_i32 = arith.constant 0 : i32
    return %arg0, %arg1 : i32, i32
  }
  func.func @transform_1(%arg0: i32, %arg1: i32) -> (i32, i32) {
    %c0_i32 = arith.constant 0 : i32
    %c0_i32_0 = arith.constant 0 : i32
    return %arg0, %c0_i32 : i32, i32
  }
  func.func @transform_2(%arg0: i32, %arg1: i32) -> (i32, i32) {
    %c0_i32 = arith.constant 0 : i32
    return %arg0, %arg1 : i32, i32
  }
}

module attributes {stable_mosaic.version = 11 : i64} {
  func.func @_logits_lse_kernel(%arg0: i32, %arg1: i32, %arg2: memref<16x64xbf16, #tpu.memory_space<vmem>>, %arg3: memref<64x512xbf16, #tpu.memory_space<vmem>>, %arg4: memref<2x512xf32, #tpu.memory_space<vmem>>, %arg5: memref<16x512xf32, #tpu.memory_space<vmem>>, %arg6: memref<16x1xf32, #tpu.memory_space<vmem>>, %arg7: memref<16x1xf32, #tpu.memory_space<vmem>>, %arg8: memref<16x1xf32, #tpu.memory_space<vmem>>) attributes {dimension_semantics = [#tpu.dimension_semantics<parallel>, #tpu.dimension_semantics<arbitrary>], iteration_bounds = array<i64: 1, 2>, scalar_prefetch = 0 : i64, scratch_operands = 2 : i64, tpu.core_type = #tpu.core_type<tc>, window_params = [{transform_indices = @transform_0, window_bounds = array<i64: 16, 64>}, {transform_indices = @transform_1, window_bounds = array<i64: 64, 512>}, {pipeline_mode = #tpu.pipeline_mode<synchronous>, transform_indices = @transform_2, window_bounds = array<i64: 2, 512>}, {transform_indices = @transform_3, window_bounds = array<i64: 16, 512>}, {transform_indices = @transform_4, window_bounds = array<i64: 16, 1>}]} {
    %c0_i32 = arith.constant 0 : i32
    %0 = arith.cmpi eq, %arg1, %c0_i32 : i32
    %1 = arith.extui %0 : i1 to i32
    %c0_i32_0 = arith.constant 0 : i32
    %2 = arith.cmpi ne, %1, %c0_i32_0 : i32
    scf.if %2 {
      %cst_18 = arith.constant 0xFF800000 : f32
      %30 = vector.broadcast %cst_18 : f32 to vector<16x1xf32>
      %c0_19 = arith.constant 0 : index
      %c0_20 = arith.constant 0 : index
      %31 = vector.load %arg7[%c0_19, %c0_20] : memref<16x1xf32, #tpu.memory_space<vmem>>, vector<16x1xf32>
      tpu.vector_store %arg7[%c0_19, %c0_20], %30 {strides = array<i32>} : memref<16x1xf32, #tpu.memory_space<vmem>>, vector<16x1xf32>,
      %cst_21 = arith.constant 0.000000e+00 : f32
      %32 = vector.broadcast %cst_21 : f32 to vector<16x1xf32>
      %c0_22 = arith.constant 0 : index
      %c0_23 = arith.constant 0 : index
      %33 = vector.load %arg8[%c0_22, %c0_23] : memref<16x1xf32, #tpu.memory_space<vmem>>, vector<16x1xf32>
      tpu.vector_store %arg8[%c0_22, %c0_23], %32 {strides = array<i32>} : memref<16x1xf32, #tpu.memory_space<vmem>>, vector<16x1xf32>,
    } else {
    }
    %3 = arith.index_cast %arg1 : i32 to index
    %c0 = arith.constant 0 : index
    %4 = vector.load %arg4[%3, %c0] : memref<2x512xf32, #tpu.memory_space<vmem>>, vector<1x512xf32>
    %c0_1 = arith.constant 0 : index
    %c0_2 = arith.constant 0 : index
    %5 = vector.load %arg2[%c0_1, %c0_2] : memref<16x64xbf16, #tpu.memory_space<vmem>>, vector<16x64xbf16>
    %c0_3 = arith.constant 0 : index
    %c0_4 = arith.constant 0 : index
    %6 = vector.load %arg3[%c0_3, %c0_4] : memref<64x512xbf16, #tpu.memory_space<vmem>>, vector<64x512xbf16>
    %cst = arith.constant dense<0.000000e+00> : vector<16x512xf32>
    %7 = tpu.matmul %5, %6, %cst {dimension_numbers = #tpu.dot_dimension_numbers<[1], [0], [0], [1], [0, 0, 1, 1], [], []>} : vector<16x64xbf16>, vector<64x512xbf16>, vector<16x512xf32> -> vector<16x512xf32>
    %8 = vector.broadcast %4 : vector<1x512xf32> to vector<16x512xf32>
    %9 = arith.addf %7, %8 : vector<16x512xf32>
    %c0_5 = arith.constant 0 : index
    %c0_6 = arith.constant 0 : index
    %10 = vector.load %arg7[%c0_5, %c0_6] : memref<16x1xf32, #tpu.memory_space<vmem>>, vector<16x1xf32>
    %cst_7 = arith.constant dense<0xFF800000> : vector<16xf32>
    %11 = vector.multi_reduction <maximumf>, %9, %cst_7 [1] : vector<16x512xf32> to vector<16xf32>
    %12 = vector.shape_cast %11 : vector<16xf32> to vector<16x1xf32>
    %13 = arith.maximumf %10, %12 : vector<16x1xf32>
    %c0_8 = arith.constant 0 : index
    %c0_9 = arith.constant 0 : index
    %14 = vector.load %arg8[%c0_8, %c0_9] : memref<16x1xf32, #tpu.memory_space<vmem>>, vector<16x1xf32>
    %15 = arith.subf %10, %13 : vector<16x1xf32>
    %16 = math.exp %15 : vector<16x1xf32>
    %17 = arith.mulf %14, %16 : vector<16x1xf32>
    %18 = vector.broadcast %13 : vector<16x1xf32> to vector<16x512xf32>
    %19 = arith.subf %9, %18 : vector<16x512xf32>
    %20 = math.exp %19 : vector<16x512xf32>
    %cst_10 = arith.constant dense<0.000000e+00> : vector<16xf32>
    %21 = vector.multi_reduction <add>, %20, %cst_10 [1] : vector<16x512xf32> to vector<16xf32>
    %22 = vector.shape_cast %21 : vector<16xf32> to vector<16x1xf32>
    %23 = arith.addf %17, %22 : vector<16x1xf32>
    %c0_11 = arith.constant 0 : index
    %c0_12 = arith.constant 0 : index
    %24 = vector.load %arg8[%c0_11, %c0_12] : memref<16x1xf32, #tpu.memory_space<vmem>>, vector<16x1xf32>
    tpu.vector_store %arg8[%c0_11, %c0_12], %23 {strides = array<i32>} : memref<16x1xf32, #tpu.memory_space<vmem>>, vector<16x1xf32>,
    %c0_13 = arith.constant 0 : index
    %c0_14 = arith.constant 0 : index
    %25 = vector.load %arg7[%c0_13, %c0_14] : memref<16x1xf32, #tpu.memory_space<vmem>>, vector<16x1xf32>
    tpu.vector_store %arg7[%c0_13, %c0_14], %13 {strides = array<i32>} : memref<16x1xf32, #tpu.memory_space<vmem>>, vector<16x1xf32>,
    %c0_15 = arith.constant 0 : index
    %c0_16 = arith.constant 0 : index
    %26 = vector.load %arg5[%c0_15, %c0_16] : memref<16x512xf32, #tpu.memory_space<vmem>>, vector<16x512xf32>
    tpu.vector_store %arg5[%c0_15, %c0_16], %9 {strides = array<i32>} : memref<16x512xf32, #tpu.memory_space<vmem>>, vector<16x512xf32>,
    %c1_i32 = arith.constant 1 : i32
    %27 = arith.cmpi eq, %arg1, %c1_i32 : i32
    %28 = arith.extui %27 : i1 to i32
    %c0_i32_17 = arith.constant 0 : i32
    %29 = arith.cmpi ne, %28, %c0_i32_17 : i32
    scf.if %29 {
      %c0_18 = arith.constant 0 : index
      %c0_19 = arith.constant 0 : index
      %30 = vector.load %arg7[%c0_18, %c0_19] : memref<16x1xf32, #tpu.memory_space<vmem>>, vector<16x1xf32>
      %c0_20 = arith.constant 0 : index
      %c0_21 = arith.constant 0 : index
      %31 = vector.load %arg8[%c0_20, %c0_21] : memref<16x1xf32, #tpu.memory_space<vmem>>, vector<16x1xf32>
      %32 = math.log %31 : vector<16x1xf32>
      %33 = arith.addf %30, %32 : vector<16x1xf32>
      %c0_22 = arith.constant 0 : index
      %c0_23 = arith.constant 0 : index
      %34 = vector.load %arg6[%c0_22, %c0_23] : memref<16x1xf32, #tpu.memory_space<vmem>>, vector<16x1xf32>
      tpu.vector_store %arg6[%c0_22, %c0_23], %33 {strides = array<i32>} : memref<16x1xf32, #tpu.memory_space<vmem>>, vector<16x1xf32>,
    } else {
    }
    return
  }
  func.func @transform_0(%arg0: i32, %arg1: i32) -> (i32, i32) {
    %c0_i32 = arith.constant 0 : i32
    %c0_i32_0 = arith.constant 0 : i32
    return %arg0, %c0_i32 : i32, i32
  }
  func.func @transform_1(%arg0: i32, %arg1: i32) -> (i32, i32) {
    %c0_i32 = arith.constant 0 : i32
    %c0_i32_0 = arith.constant 0 : i32
    return %c0_i32, %arg1 : i32, i32
  }
  func.func @transform_2(%arg0: i32, %arg1: i32) -> (i32, i32) {
    %c0_i32 = arith.constant 0 : i32
    %c0_i32_0 = arith.constant 0 : i32
    %c0_i32_1 = arith.constant 0 : i32
    return %c0_i32, %c0_i32_0 : i32, i32
  }
  func.func @transform_3(%arg0: i32, %arg1: i32) -> (i32, i32) {
    %c0_i32 = arith.constant 0 : i32
    return %arg0, %arg1 : i32, i32
  }
  func.func @transform_4(%arg0: i32, %arg1: i32) -> (i32, i32) {
    %c0_i32 = arith.constant 0 : i32
    %c0_i32_0 = arith.constant 0 : i32
    return %arg0, %c0_i32 : i32, i32
  }
}

</mosaic_0001>

<llo_original>
// kernel: generator_forward.3
$region0: #{generator_forward.3}
  #allocation0 [shape = 'u32[]', space=smem, size = 0x4, offset = 0x4, fixed_abs, tag = 'smem constant byte address 0x4 - core index']
  #allocation1 [shape = 'u32[72,128]{1,0:T(1,128)}', space=vmem, size = 0x9000, scoped, tag = 'internal scratch']
  %s0 = inlined_call_operand.vmem [shape: f32[16,1024], index: 0, kind: input, shape index: {}]
  %s1 = inlined_call_operand.vmem [shape: f32[16,1], index: 1, kind: input, shape index: {}]
  %s2 = inlined_call_operand.hbm [shape: f32[16,1000], index: 2, kind: output, shape index: {}]
  %s3 = sld [smem:[#allocation0]]
  $region64: #{generator_forward.3} parent=0
    _
  %s5 = ssub.s32 1, %s3
  %s6 = scalar_select 0, %s5, %s3
  $region1: #{generator_forward.3} parent=0
    #allocation2 [shape = 'u8[65536]{0}', space=vmem, size = 0x10000, scoped, tag = 'input window, operand 0']
    #allocation3 [shape = 'u8[65536]{0}', space=vmem, size = 0x10000, scoped, tag = 'output window, operand 0']
    #allocation4 [shape = 's32[2]{0}', space=sflag, size = 0x8, scoped, tag = 'scoped memory for generator_forward.3']
    %7 = vsyncpa [#allocation4], 0
    %s8 = scalar_lea.sflag [#allocation4], 1
    %9 = vsyncpa %s8, 0
    loop: start=0, step=1, limit=4
    $region2: #{generator_forward.3} parent=1 // loop_pre_header
      _
    $region3: #{generator_forward.3} parent=1 // loop_header
      %s11 = sphi 0, %s15
      %p12 = scmp.ge.s32.totalorder %s11, 4
      %s18 = sphi 0, %s30
      %s19 = sphi 0, %s26
      %s20 = sphi 0, %s18
      %s21 = sphi 0, %s19
      %s22 = sphi 0, %s20
      %s23 = sphi 0, %s21
      %s35 = sphi 0, %s37
      %s38 = sphi 0, %s35
      %s39 = sphi 0, %s38
      %s55 = sphi 0, %s39
      %s61 = sphi 0, %s63
      %s64 = sphi 0, %s61
      %s65 = sphi 0, %s64
      %s81 = sphi 0, %s65
      %s89 = sphi 0, %s91
      %s92 = sphi 0, %s89
      %s93 = sphi 0, %s92
      %s109 = sphi 0, %s93
    $region4: #{generator_forward.3} parent=1 // loop_header_branch
      %14 = sbr.rel (%p12) target = $region8
    $region5: #{generator_forward.3} parent=1 // loop_body
      %s16 = ssub.s32 %s11, 1
      %s17 = ssub.s32 %s11, 2
      %s24 = sadd.s32 1, %s19
      %p25 = scmp.ge.s32.totalorder %s24, 2
      %s26 = scalar_select %p25, 0, %s24
      %s27 = sadd.s32 1, %s18
      %s28 = scalar_select %p25, %s27, %s18
      %p29 = scmp.ge.s32.totalorder %s28, 1
      %s30 = scalar_select %p29, 0, %s28
      %s31 = ssub.s32 %s18, %s30
      %s32 = ssub.s32 %s19, %s26
      %s33 = sor.u32 %s31, %s32
      %p34 = scmp.eq.s32.totalorder %s33, 0
      %s36 = sadd.s32 %s35, 1
      %s37 = scalar_select %p34, %s35, %s36
      %p40 = pneg %p34
      %p41 = scmp.eq.s32.totalorder %s11, 1
      %p42 = por %p40, %p41
      %p43 = scmp.ne.s32.totalorder %s35, %s38
      %p44 = scmp.eq.s32.totalorder %s11, 0
      %p45 = por %p43, %p44
      %p46 = scmp.ne.s32.totalorder %s35, %s38
      %p47 = scmp.eq.s32.totalorder %s16, 1
      %p48 = por %p46, %p47
      %p49 = scmp.ne.s32.totalorder %s38, %s39
      %p50 = scmp.eq.s32.totalorder %s16, 0
      %p51 = por %p49, %p50
      %p52 = scmp.ne.s32.totalorder %s38, %s39
      %p53 = scmp.eq.s32.totalorder %s17, 1
      %p54 = por %p52, %p53
      %p56 = scmp.ne.s32.totalorder %s39, %s55
      %p57 = scmp.eq.s32.totalorder %s17, 0
      %p58 = por %p56, %p57
      %s59 = ssub.s32 %s18, %s30
      %p60 = scmp.eq.s32.totalorder %s59, 0
      %s62 = sadd.s32 %s61, 1
      %s63 = scalar_select %p60, %s61, %s62
      %p66 = pneg %p60
      %p67 = scmp.eq.s32.totalorder %s11, 1
      %p68 = por %p66, %p67
      %p69 = scmp.ne.s32.totalorder %s61, %s64
      %p70 = scmp.eq.s32.totalorder %s11, 0
      %p71 = por %p69, %p70
      %p72 = scmp.ne.s32.totalorder %s61, %s64
      %p73 = scmp.eq.s32.totalorder %s16, 1
      %p74 = por %p72, %p73
      %p75 = scmp.ne.s32.totalorder %s64, %s65
      %p76 = scmp.eq.s32.totalorder %s16, 0
      %p77 = por %p75, %p76
      %p78 = scmp.ne.s32.totalorder %s64, %s65
      %p79 = scmp.eq.s32.totalorder %s17, 1
      %p80 = por %p78, %p79
      %p82 = scmp.ne.s32.totalorder %s65, %s81
      %p83 = scmp.eq.s32.totalorder %s17, 0
      %p84 = por %p82, %p83
      %s85 = ssub.s32 %s18, %s30
      %s86 = ssub.s32 %s19, %s26
      %s87 = sor.u32 %s85, %s86
      %p88 = scmp.eq.s32.totalorder %s87, 0
      %s90 = sadd.s32 %s89, 1
      %s91 = scalar_select %p88, %s89, %s90
      %p94 = pneg %p88
      %p95 = scmp.eq.s32.totalorder %s11, 1
      %p96 = por %p94, %p95
      %p97 = scmp.ne.s32.totalorder %s89, %s92
      %p98 = scmp.eq.s32.totalorder %s11, 0
      %p99 = por %p97, %p98
      %p100 = scmp.ne.s32.totalorder %s89, %s92
      %p101 = scmp.eq.s32.totalorder %s16, 1
      %p102 = por %p100, %p101
      %p103 = scmp.ne.s32.totalorder %s92, %s93
      %p104 = scmp.eq.s32.totalorder %s16, 0
      %p105 = por %p103, %p104
      %p106 = scmp.ne.s32.totalorder %s92, %s93
      %p107 = scmp.eq.s32.totalorder %s17, 1
      %p108 = por %p106, %p107
      %p110 = scmp.ne.s32.totalorder %s93, %s109
      %p111 = scmp.eq.s32.totalorder %s17, 0
      %p112 = por %p110, %p111
      %p113 = scmp.le.s32.totalorder 1, %s11
      %p114 = scmp.lt.s32.totalorder %s11, 3
      %p115 = pnand %p113, %p114
      %p116 = pneg %p115
      // Predicated region
      $region9: #{generator_forward.3} parent=5 // pred_check
        _
      $region10: #{generator_forward.3} parent=5 // pred_check_branch
        %118 = sbr.rel (%p115) target = $region12
      $region11: #{generator_forward.3} parent=5 // pred_region
        %s119 = ssub.s32 %s11, 1
        // Predicated region
        $region13: #{generator_forward.3} parent=11 // pred_check
          %p120 = pneg %p77
        $region14: #{generator_forward.3} parent=11 // pred_check_branch
          %122 = sbr.rel (%p120) target = $region16
        $region15: #{generator_forward.3} parent=11 // pred_region
          %s123 = smul.u32 2, %s20
          %p124 = scmp.lt.s32.totalorder %s123, 1
          %s125 = scalar_select %p124, %s123, 1
          %s126 = smul.addr %s125, 8
          %s127 = scalar_lea.vmem %s1, %s126
          %s128 = smul.u32 2, %s20
        $region16: #{generator_forward.3} parent=11 // pred_fallthru
          _
      $region12: #{generator_forward.3} parent=5 // pred_fallthru
        _
      %p129 = scmp.lt.s32.totalorder %s11, 2
      // Predicated region
      $region17: #{generator_forward.3} parent=5 // pred_check
        %p130 = pneg %p129
      $region18: #{generator_forward.3} parent=5 // pred_check_branch
        %132 = sbr.rel (%p130) target = $region20
      $region19: #{generator_forward.3} parent=5 // pred_region
        // Predicated region
        $region21: #{generator_forward.3} parent=19 // pred_check
          %p133 = pneg %p45
        $region22: #{generator_forward.3} parent=19 // pred_check_branch
          %135 = sbr.rel (%p133) target = $region24
        $region23: #{generator_forward.3} parent=19 // pred_region
          %s136 = sand.u32 %s35, 1
          %s137 = sand.u32 %s35, 1
          %s138 = smul.addr %s137, 64
          %s139 = scalar_lea.vmem [#allocation2], %s138
          %s140 = smul.u32 2, %s18
          %s141 = smul.u32 4, %s19
          %s142 = smul.addr %s140, 8
          %s143 = sadd.s32 %s141, %s142
          %s144 = smul.addr %s143, 8
          %s145 = scalar_lea.vmem %s0, %s144
          // Predicated region
          $region25: #{generator_forward.3} parent=23 // pred_check
            _
          $region26: #{generator_forward.3} parent=23 // pred_check_branch
            %147 = sbr.rel (0) target = $region28
          $region27: #{generator_forward.3} parent=23 // pred_region
            // Predicated region
            $region29: #{generator_forward.3} parent=27 // pred_check
              _
            $region30: #{generator_forward.3} parent=27 // pred_check_branch
              %149 = sbr.rel (0) target = $region32
            $region31: #{generator_forward.3} parent=27 // pred_region
              loop: start=0, step=1, limit=1
              $region33: #{generator_forward.3} parent=31 // loop_pre_header
                _
              $region34: #{generator_forward.3} parent=31 // loop_header
                %s151 = sphi 0, %s155
                %p152 = scmp.ge.s32.totalorder %s151, 1
                %s156 = sphi %s145, %s145
                %s157 = sphi %s139, %s139
              $region35: #{generator_forward.3} parent=31 // loop_header_branch
                %154 = sbr.rel (%p152) target = $region39
              $region36: #{generator_forward.3} parent=31 // loop_body
                %v158 = vld [vmem:[%s156] sm:$0xff]
                %159 = vst [vmem:[%s157] sm:$0xff] %v158
                %v160 = vld [vmem:[%s156 + $0x8] sm:$0xff]
                %161 = vst [vmem:[%s157 + $0x8] sm:$0xff] %v160
                %v162 = vld [vmem:[%s156 + $0x10] sm:$0xff]
                %163 = vst [vmem:[%s157 + $0x10] sm:$0xff] %v162
                %v164 = vld [vmem:[%s156 + $0x18] sm:$0xff]
                %165 = vst [vmem:[%s157 + $0x18] sm:$0xff] %v164
                %v166 = vld [vmem:[%s156 + $0x40] sm:$0xff]
                %167 = vst [vmem:[%s157 + $0x20] sm:$0xff] %v166
                %v168 = vld [vmem:[%s156 + $0x48] sm:$0xff]
                %169 = vst [vmem:[%s157 + $0x28] sm:$0xff] %v168
                %v170 = vld [vmem:[%s156 + $0x50] sm:$0xff]
                %171 = vst [vmem:[%s157 + $0x30] sm:$0xff] %v170
                %v172 = vld [vmem:[%s156 + $0x58] sm:$0xff]
                %173 = vst [vmem:[%s157 + $0x38] sm:$0xff] %v172
              $region37: #{generator_forward.3} parent=31 // loop_footer
                %s155 = sadd.s32 1, %s151
              $region38: #{generator_forward.3} parent=31 // loop_footer_branch
                %150 = sbr.rel target = $region34
              $region39: #{generator_forward.3} parent=31 // loop_exit
                _
            $region32: #{generator_forward.3} parent=27 // pred_fallthru
              _
            // Predicated region
            $region40: #{generator_forward.3} parent=27 // pred_check
              _
            $region41: #{generator_forward.3} parent=27 // pred_check_branch
              %175 = sbr.rel target = $region43
            $region42: #{generator_forward.3} parent=27 // pred_region
              _
            $region43: #{generator_forward.3} parent=27 // pred_fallthru
              _
          $region28: #{generator_forward.3} parent=23 // pred_fallthru
            _
          %176 = vnop
        $region24: #{generator_forward.3} parent=19 // pred_fallthru
          _
      $region20: #{generator_forward.3} parent=5 // pred_fallthru
        _
      %p177 = scmp.le.s32.totalorder 1, %s11
      %p178 = scmp.lt.s32.totalorder %s11, 3
      %p179 = pnand %p177, %p178
      %p180 = pneg %p179
      // Predicated region
      $region44: #{generator_forward.3} parent=5 // pred_check
        _
      $region45: #{generator_forward.3} parent=5 // pred_check_branch
        %182 = sbr.rel (%p179) target = $region47
      $region46: #{generator_forward.3} parent=5 // pred_region
        %s183 = ssub.s32 %s11, 1
        %s184 = sand.u32 %s38, 1
        %s185 = sand.u32 %s38, 1
        %s186 = smul.addr %s185, 64
        %s187 = scalar_lea.vmem [#allocation2], %s186
        // Predicated region
        $region48: #{generator_forward.3} parent=46 // pred_check
          %p188 = pneg %p51
        $region49: #{generator_forward.3} parent=46 // pred_check_branch
          %190 = sbr.rel (%p188) target = $region51
        $region50: #{generator_forward.3} parent=46 // pred_region
          _
        $region51: #{generator_forward.3} parent=46 // pred_fallthru
          _
        %s191 = sand.u32 %s38, 1
        %s192 = sand.u32 %s38, 1
        %s193 = smul.addr %s192, 64
        %s194 = scalar_lea.vmem [#allocation2], %s193
        %p195 = pneg %p51
        %p196 = pneg %p48
        %s197 = smul.u32 2, %s20
        %p198 = scmp.lt.s32.totalorder %s197, 1
        %s199 = scalar_select %p198, %s197, 1
        %s200 = smul.addr %s199, 8
        %s201 = scalar_lea.vmem %s1, %s200
        %p202 = pneg %p77
        %p203 = pneg %p74
        %p204 = pneg %p105
        %p205 = pneg %p102
        %s206 = sand.u32 %s92, 1
        %s207 = scalar_lea.sflag [#allocation4], %s206
        %s208 = sand.u32 %s92, 1
        %s209 = smul.addr %s208, 64
        %s210 = scalar_lea.vmem [#allocation3], %s209
        %s211 = smul.u32 2, %s20
        %s212 = smul.u32 4, %s21
        %s213 = smul.u32 2, %s20
        %p214 = scmp.lt.s32.totalorder %s213, 1
        %s215 = scalar_select %p214, %s213, 1
        %s216 = smul.addr %s215, 8
        %s217 = scalar_lea.vmem %s1, %s216
        %s218 = smul.u32 2, %s20
        %s219 = smul.u32 2, %s20
        %s220 = smul.u32 4, %s21
        %v221 = vld [vmem:[%s187] sm:$0xff]
        %v222 = vld [vmem:[%s187 + $0x8] sm:$0xff]
        %v223 = vld [vmem:[%s187 + $0x10] sm:$0xff]
        %v224 = vld [vmem:[%s187 + $0x18] sm:$0xff]
        %v225 = vld [vmem:[%s187 + $0x20] sm:$0xff]
        %v226 = vld [vmem:[%s187 + $0x28] sm:$0xff]
        %v227 = vld [vmem:[%s187 + $0x30] sm:$0xff]
        %v228 = vld [vmem:[%s187 + $0x38] sm:$0xff]
        %v229 = vld [vmem:[%s217] sm:$0xff]
        %v230 = vld [vmem:[%s217 + $0x8] sm:$0xff]
        %232 = vset.pattern.permute.xlu0 0
        %233 = vperm.xlu0 %232, %v229
        %v234 = vpop.permute.xlu0 %233
        %237 = vset.pattern.permute.xlu0 0
        %238 = vperm.xlu0 %237, %v230
        %v239 = vpop.permute.xlu0 %238
        %v241 = vsub.f32 %v221, %v234
        %v242 = vsub.f32 %v222, %v234
        %v243 = vsub.f32 %v223, %v234
        %v244 = vsub.f32 %v224, %v234
        %v245 = vsub.f32 %v225, %v239
        %v246 = vsub.f32 %v226, %v239
        %v247 = vsub.f32 %v227, %v239
        %v248 = vsub.f32 %v228, %v239
        %249 = vst [vmem:[%s210] sm:$0xff] %v241
        %250 = vst [vmem:[%s210 + $0x8] sm:$0xff] %v242
        %251 = vst [vmem:[%s210 + $0x10] sm:$0xff] %v243
        %252 = vst [vmem:[%s210 + $0x18] sm:$0xff] %v244
        %253 = vst [vmem:[%s210 + $0x20] sm:$0xff] %v245
        %254 = vst [vmem:[%s210 + $0x28] sm:$0xff] %v246
        %255 = vst [vmem:[%s210 + $0x30] sm:$0xff] %v247
        %256 = vst [vmem:[%s210 + $0x38] sm:$0xff] %v248
        %s257 = sand.u32 %s92, 1
        %s258 = scalar_lea.sflag [#allocation4], %s257
        %s259 = sand.u32 %s92, 1
        %s260 = smul.addr %s259, 64
        %s261 = scalar_lea.vmem [#allocation3], %s260
        // Predicated region
        $region52: #{generator_forward.3} parent=46 // pred_check
          %p262 = pneg %p102
        $region53: #{generator_forward.3} parent=46 // pred_check_branch
          %264 = sbr.rel (%p262) target = $region55
        $region54: #{generator_forward.3} parent=46 // pred_region
          %s265 = smul.u32 2, %s20
          %s266 = smul.u32 4, %s21
          %268 = vsyncadd %s258, 0
          %s269 = smul.addr %s265, 8
          %s270 = sadd.s32 %s266, %s269
          %s271 = smul.addr %s270, 8
          %s272 = scalar_lea.hbm %s2, %s271
          %s273 = sshll.u32 %s261, 4
          %s274 = int_to_ptr.vmem [resolvable:$true] %s273
          %s275 = sshll.u32 %s272, 4
          %s276 = int_to_ptr.hbm [resolvable:$true] %s275
          %281 = dma.vmem_to_hbm [thread:$0]  %s274, 1024, %s276, %s258, 512, 1024, 32
        $region55: #{generator_forward.3} parent=46 // pred_fallthru
          _
      $region47: #{generator_forward.3} parent=5 // pred_fallthru
        _
      %p282 = scmp.le.s32.totalorder 2, %s11
      // Predicated region
      $region56: #{generator_forward.3} parent=5 // pred_check
        %p283 = pneg %p282
      $region57: #{generator_forward.3} parent=5 // pred_check_branch
        %285 = sbr.rel (%p283) target = $region59
      $region58: #{generator_forward.3} parent=5 // pred_region
        %s286 = ssub.s32 %s11, 2
        // Predicated region
        $region60: #{generator_forward.3} parent=58 // pred_check
          %p287 = pneg %p108
        $region61: #{generator_forward.3} parent=58 // pred_check_branch
          %289 = sbr.rel (%p287) target = $region63
        $region62: #{generator_forward.3} parent=58 // pred_region
          %s290 = sand.u32 %s93, 1
          %s291 = scalar_lea.sflag [#allocation4], %s290
          %s292 = sand.u32 %s93, 1
          %s293 = smul.addr %s292, 64
          %s294 = scalar_lea.vmem [#allocation3], %s293
          %296 = dma.done %s291, 1024
        $region63: #{generator_forward.3} parent=58 // pred_fallthru
          _
      $region59: #{generator_forward.3} parent=5 // pred_fallthru
        _
    $region6: #{generator_forward.3} parent=1 // loop_footer
      %s15 = sadd.s32 1, %s11
    $region7: #{generator_forward.3} parent=1 // loop_footer_branch
      %10 = sbr.rel target = $region3
    $region8: #{generator_forward.3} parent=1 // loop_exit
      _
    %297 = vsyncpa [#allocation4], 1
    %s298 = scalar_lea.sflag [#allocation4], 1
    %299 = vsyncpa %s298, 1

// kernel: generator_forward.2
$region0: #{generator_forward.2}
  #allocation0 [shape = 'u32[]', space=smem, size = 0x4, offset = 0x4, fixed_abs, tag = 'smem constant byte address 0x4 - core index']
  #allocation1 [shape = 'u32[72,128]{1,0:T(1,128)}', space=vmem, size = 0x9000, scoped, tag = 'internal scratch']
  #allocation2 [shape = 'f32[16,1]{1,0:T(8,128)}', space=vmem, size = 0x2000, scoped, tag = 'scratch operand']
  #allocation3 [shape = 'f32[16,1]{1,0:T(8,128)}', space=vmem, size = 0x2000, scoped, tag = 'scratch operand']
  %s0 = inlined_call_operand.vmem [shape: bf16[16,64], index: 0, kind: input, shape index: {}]
  %s1 = inlined_call_operand.vmem [shape: bf16[64,1024], index: 1, kind: input, shape index: {}]
  %s2 = inlined_call_operand.vmem [shape: f32[2,512], index: 2, kind: input, shape index: {}]
  %s3 = inlined_call_operand.vmem [shape: f32[16,1024], index: 3, kind: output, shape index: {0}]
  %s4 = inlined_call_operand.vmem [shape: f32[16,1], index: 4, kind: output, shape index: {1}]
  %5 = xla_tuple %s3, %s4
  %s6 = sld [smem:[#allocation0]]
  $region103: #{generator_forward.2} parent=0
    _
  %s8 = ssub.s32 1, %s6
  %s9 = scalar_select 0, %s8, %s6
  $region1: #{generator_forward.2} parent=0
    #allocation4 [shape = 'u8[131072]{0}', space=vmem, size = 0x20000, scoped, tag = 'input window, operand 1']
    #allocation5 [shape = 'u8[65536]{0}', space=vmem, size = 0x10000, scoped, tag = 'output window, operand 0']
    loop: start=0, step=1, limit=4
    $region2: #{generator_forward.2} parent=1 // loop_pre_header
      _
    $region3: #{generator_forward.2} parent=1 // loop_header
      %s11 = sphi 0, %s15
      %p12 = scmp.ge.s32.totalorder %s11, 4
      %s18 = sphi 0, %s30
      %s19 = sphi 0, %s26
      %s20 = sphi 0, %s18
      %s21 = sphi 0, %s19
      %s22 = sphi 0, %s20
      %s23 = sphi 0, %s21
      %s33 = sphi 0, %s35
      %s36 = sphi 0, %s33
      %s37 = sphi 0, %s36
      %s53 = sphi 0, %s37
      %s59 = sphi 0, %s61
      %s62 = sphi 0, %s59
      %s63 = sphi 0, %s62
      %s79 = sphi 0, %s63
      %s83 = sphi 0, %s83
      %s85 = sphi 0, %s83
      %s86 = sphi 0, %s85
      %s100 = sphi 0, %s86
      %s108 = sphi 0, %s110
      %s111 = sphi 0, %s108
      %s112 = sphi 0, %s111
      %s128 = sphi 0, %s112
      %s134 = sphi 0, %s136
      %s137 = sphi 0, %s134
      %s138 = sphi 0, %s137
      %s154 = sphi 0, %s138
    $region4: #{generator_forward.2} parent=1 // loop_header_branch
      %14 = sbr.rel (%p12) target = $region8
    $region5: #{generator_forward.2} parent=1 // loop_body
      %s16 = ssub.s32 %s11, 1
      %s17 = ssub.s32 %s11, 2
      %s24 = sadd.s32 1, %s19
      %p25 = scmp.ge.s32.totalorder %s24, 2
      %s26 = scalar_select %p25, 0, %s24
      %s27 = sadd.s32 1, %s18
      %s28 = scalar_select %p25, %s27, %s18
      %p29 = scmp.ge.s32.totalorder %s28, 1
      %s30 = scalar_select %p29, 0, %s28
      %s31 = ssub.s32 %s18, %s30
      %p32 = scmp.eq.s32.totalorder %s31, 0
      %s34 = sadd.s32 %s33, 1
      %s35 = scalar_select %p32, %s33, %s34
      %p38 = pneg %p32
      %p39 = scmp.eq.s32.totalorder %s11, 1
      %p40 = por %p38, %p39
      %p41 = scmp.ne.s32.totalorder %s33, %s36
      %p42 = scmp.eq.s32.totalorder %s11, 0
      %p43 = por %p41, %p42
      %p44 = scmp.ne.s32.totalorder %s33, %s36
      %p45 = scmp.eq.s32.totalorder %s16, 1
      %p46 = por %p44, %p45
      %p47 = scmp.ne.s32.totalorder %s36, %s37
      %p48 = scmp.eq.s32.totalorder %s16, 0
      %p49 = por %p47, %p48
      %p50 = scmp.ne.s32.totalorder %s36, %s37
      %p51 = scmp.eq.s32.totalorder %s17, 1
      %p52 = por %p50, %p51
      %p54 = scmp.ne.s32.totalorder %s37, %s53
      %p55 = scmp.eq.s32.totalorder %s17, 0
      %p56 = por %p54, %p55
      %s57 = ssub.s32 %s19, %s26
      %p58 = scmp.eq.s32.totalorder %s57, 0
      %s60 = sadd.s32 %s59, 1
      %s61 = scalar_select %p58, %s59, %s60
      %p64 = pneg %p58
      %p65 = scmp.eq.s32.totalorder %s11, 1
      %p66 = por %p64, %p65
      %p67 = scmp.ne.s32.totalorder %s59, %s62
      %p68 = scmp.eq.s32.totalorder %s11, 0
      %p69 = por %p67, %p68
      %p70 = scmp.ne.s32.totalorder %s59, %s62
      %p71 = scmp.eq.s32.totalorder %s16, 1
      %p72 = por %p70, %p71
      %p73 = scmp.ne.s32.totalorder %s62, %s63
      %p74 = scmp.eq.s32.totalorder %s16, 0
      %p75 = por %p73, %p74
      %p76 = scmp.ne.s32.totalorder %s62, %s63
      %p77 = scmp.eq.s32.totalorder %s17, 1
      %p78 = por %p76, %p77
      %p80 = scmp.ne.s32.totalorder %s63, %s79
      %p81 = scmp.eq.s32.totalorder %s17, 0
      %p82 = por %p80, %p81
      %s84 = sadd.s32 %s83, 1
      %p87 = scmp.eq.s32.totalorder %s11, 1
      %p88 = scmp.ne.s32.totalorder %s83, %s85
      %p89 = scmp.eq.s32.totalorder %s11, 0
      %p90 = por %p88, %p89
      %p91 = scmp.ne.s32.totalorder %s83, %s85
      %p92 = scmp.eq.s32.totalorder %s16, 1
      %p93 = por %p91, %p92
      %p94 = scmp.ne.s32.totalorder %s85, %s86
      %p95 = scmp.eq.s32.totalorder %s16, 0
      %p96 = por %p94, %p95
      %p97 = scmp.ne.s32.totalorder %s85, %s86
      %p98 = scmp.eq.s32.totalorder %s17, 1
      %p99 = por %p97, %p98
      %p101 = scmp.ne.s32.totalorder %s86, %s100
      %p102 = scmp.eq.s32.totalorder %s17, 0
      %p103 = por %p101, %p102
      %s104 = ssub.s32 %s18, %s30
      %s105 = ssub.s32 %s19, %s26
      %s106 = sor.u32 %s104, %s105
      %p107 = scmp.eq.s32.totalorder %s106, 0
      %s109 = sadd.s32 %s108, 1
      %s110 = scalar_select %p107, %s108, %s109
      %p113 = pneg %p107
      %p114 = scmp.eq.s32.totalorder %s11, 1
      %p115 = por %p113, %p114
      %p116 = scmp.ne.s32.totalorder %s108, %s111
      %p117 = scmp.eq.s32.totalorder %s11, 0
      %p118 = por %p116, %p117
      %p119 = scmp.ne.s32.totalorder %s108, %s111
      %p120 = scmp.eq.s32.totalorder %s16, 1
      %p121 = por %p119, %p120
      %p122 = scmp.ne.s32.totalorder %s111, %s112
      %p123 = scmp.eq.s32.totalorder %s16, 0
      %p124 = por %p122, %p123
      %p125 = scmp.ne.s32.totalorder %s111, %s112
      %p126 = scmp.eq.s32.totalorder %s17, 1
      %p127 = por %p125, %p126
      %p129 = scmp.ne.s32.totalorder %s112, %s128
      %p130 = scmp.eq.s32.totalorder %s17, 0
      %p131 = por %p129, %p130
      %s132 = ssub.s32 %s18, %s30
      %p133 = scmp.eq.s32.totalorder %s132, 0
      %s135 = sadd.s32 %s134, 1
      %s136 = scalar_select %p133, %s134, %s135
      %p139 = pneg %p133
      %p140 = scmp.eq.s32.totalorder %s11, 1
      %p141 = por %p139, %p140
      %p142 = scmp.ne.s32.totalorder %s134, %s137
      %p143 = scmp.eq.s32.totalorder %s11, 0
      %p144 = por %p142, %p143
      %p145 = scmp.ne.s32.totalorder %s134, %s137
      %p146 = scmp.eq.s32.totalorder %s16, 1
      %p147 = por %p145, %p146
      %p148 = scmp.ne.s32.totalorder %s137, %s138
      %p149 = scmp.eq.s32.totalorder %s16, 0
      %p150 = por %p148, %p149
      %p151 = scmp.ne.s32.totalorder %s137, %s138
      %p152 = scmp.eq.s32.totalorder %s17, 1
      %p153 = por %p151, %p152
      %p155 = scmp.ne.s32.totalorder %s138, %s154
      %p156 = scmp.eq.s32.totalorder %s17, 0
      %p157 = por %p155, %p156
      %p158 = scmp.le.s32.totalorder 1, %s11
      %p159 = scmp.lt.s32.totalorder %s11, 3
      %p160 = pnand %p158, %p159
      %p161 = pneg %p160
      // Predicated region
      $region9: #{generator_forward.2} parent=5 // pred_check
        _
      $region10: #{generator_forward.2} parent=5 // pred_check_branch
        %163 = sbr.rel (%p160) target = $region12
      $region11: #{generator_forward.2} parent=5 // pred_region
        %s164 = ssub.s32 %s11, 1
        // Predicated region
        $region13: #{generator_forward.2} parent=11 // pred_check
          %p165 = pneg %p49
        $region14: #{generator_forward.2} parent=11 // pred_check_branch
          %167 = sbr.rel (%p165) target = $region16
        $region15: #{generator_forward.2} parent=11 // pred_region
          %s168 = smul.u32 2, %s20
          %p169 = scmp.lt.s32.totalorder %s168, 1
          %s170 = scalar_select %p169, %s168, 1
          %s171 = smul.addr %s170, 4
          %s172 = scalar_lea.vmem %s0, %s171
          %s173 = smul.u32 2, %s20
        $region16: #{generator_forward.2} parent=11 // pred_fallthru
          _
        // Predicated region
        $region17: #{generator_forward.2} parent=11 // pred_check
          %p174 = pneg %p96
        $region18: #{generator_forward.2} parent=11 // pred_check_branch
          %176 = sbr.rel (%p174) target = $region20
        $region19: #{generator_forward.2} parent=11 // pred_region
          _
        $region20: #{generator_forward.2} parent=11 // pred_fallthru
          _
      $region12: #{generator_forward.2} parent=5 // pred_fallthru
        _
      %p177 = scmp.lt.s32.totalorder %s11, 2
      // Predicated region
      $region21: #{generator_forward.2} parent=5 // pred_check
        %p178 = pneg %p177
      $region22: #{generator_forward.2} parent=5 // pred_check_branch
        %180 = sbr.rel (%p178) target = $region24
      $region23: #{generator_forward.2} parent=5 // pred_region
        // Predicated region
        $region25: #{generator_forward.2} parent=23 // pred_check
          %p181 = pneg %p69
        $region26: #{generator_forward.2} parent=23 // pred_check_branch
          %183 = sbr.rel (%p181) target = $region28
        $region27: #{generator_forward.2} parent=23 // pred_region
          %s184 = sand.u32 %s59, 1
          %s185 = sand.u32 %s59, 1
          %s186 = smul.addr %s185, 128
          %s187 = scalar_lea.vmem [#allocation4], %s186
          %s188 = smul.u32 4, %s19
          %s189 = smul.addr %s188, 4
          %s190 = scalar_lea.vmem %s1, %s189
          // Predicated region
          $region29: #{generator_forward.2} parent=27 // pred_check
            _
          $region30: #{generator_forward.2} parent=27 // pred_check_branch
            %192 = sbr.rel (0) target = $region32
          $region31: #{generator_forward.2} parent=27 // pred_region
            // Predicated region
            $region33: #{generator_forward.2} parent=31 // pred_check
              _
            $region34: #{generator_forward.2} parent=31 // pred_check_branch
              %194 = sbr.rel (0) target = $region36
            $region35: #{generator_forward.2} parent=31 // pred_region
              loop: start=0, step=1, limit=1
              $region37: #{generator_forward.2} parent=35 // loop_pre_header
                _
              $region38: #{generator_forward.2} parent=35 // loop_header
                %s196 = sphi 0, %s200
                %p197 = scmp.ge.s32.totalorder %s196, 1
                %s201 = sphi %s190, %s190
                %s202 = sphi %s187, %s187
              $region39: #{generator_forward.2} parent=35 // loop_header_branch
                %199 = sbr.rel (%p197) target = $region43
              $region40: #{generator_forward.2} parent=35 // loop_body
                %v203 = vld [vmem:[%s201] sm:$0xff]
                %204 = vst [vmem:[%s202] sm:$0xff] %v203
                %v205 = vld [vmem:[%s201 + $0x8] sm:$0xff]
                %206 = vst [vmem:[%s202 + $0x8] sm:$0xff] %v205
                %v207 = vld [vmem:[%s201 + $0x20] sm:$0xff]
                %208 = vst [vmem:[%s202 + $0x10] sm:$0xff] %v207
                %v209 = vld [vmem:[%s201 + $0x28] sm:$0xff]
                %210 = vst [vmem:[%s202 + $0x18] sm:$0xff] %v209
                %v211 = vld [vmem:[%s201 + $0x40] sm:$0xff]
                %212 = vst [vmem:[%s202 + $0x20] sm:$0xff] %v211
                %v213 = vld [vmem:[%s201 + $0x48] sm:$0xff]
                %214 = vst [vmem:[%s202 + $0x28] sm:$0xff] %v213
                %v215 = vld [vmem:[%s201 + $0x60] sm:$0xff]
                %216 = vst [vmem:[%s202 + $0x30] sm:$0xff] %v215
                %v217 = vld [vmem:[%s201 + $0x68] sm:$0xff]
                %218 = vst [vmem:[%s202 + $0x38] sm:$0xff] %v217
                %v219 = vld [vmem:[%s201 + $0x80] sm:$0xff]
                %220 = vst [vmem:[%s202 + $0x40] sm:$0xff] %v219
                %v221 = vld [vmem:[%s201 + $0x88] sm:$0xff]
                %222 = vst [vmem:[%s202 + $0x48] sm:$0xff] %v221
                %v223 = vld [vmem:[%s201 + $0xa0] sm:$0xff]
                %224 = vst [vmem:[%s202 + $0x50] sm:$0xff] %v223
                %v225 = vld [vmem:[%s201 + $0xa8] sm:$0xff]
                %226 = vst [vmem:[%s202 + $0x58] sm:$0xff] %v225
                %v227 = vld [vmem:[%s201 + $0xc0] sm:$0xff]
                %228 = vst [vmem:[%s202 + $0x60] sm:$0xff] %v227
                %v229 = vld [vmem:[%s201 + $0xc8] sm:$0xff]
                %230 = vst [vmem:[%s202 + $0x68] sm:$0xff] %v229
                %v231 = vld [vmem:[%s201 + $0xe0] sm:$0xff]
                %232 = vst [vmem:[%s202 + $0x70] sm:$0xff] %v231
                %v233 = vld [vmem:[%s201 + $0xe8] sm:$0xff]
                %234 = vst [vmem:[%s202 + $0x78] sm:$0xff] %v233
              $region41: #{generator_forward.2} parent=35 // loop_footer
                %s200 = sadd.s32 1, %s196
              $region42: #{generator_forward.2} parent=35 // loop_footer_branch
                %195 = sbr.rel target = $region38
              $region43: #{generator_forward.2} parent=35 // loop_exit
                _
            $region36: #{generator_forward.2} parent=31 // pred_fallthru
              _
            // Predicated region
            $region44: #{generator_forward.2} parent=31 // pred_check
              _
            $region45: #{generator_forward.2} parent=31 // pred_check_branch
              %236 = sbr.rel target = $region47
            $region46: #{generator_forward.2} parent=31 // pred_region
              _
            $region47: #{generator_forward.2} parent=31 // pred_fallthru
              _
          $region32: #{generator_forward.2} parent=27 // pred_fallthru
            _
          %237 = vnop
        $region28: #{generator_forward.2} parent=23 // pred_fallthru
          _
      $region24: #{generator_forward.2} parent=5 // pred_fallthru
        _
      %p238 = scmp.le.s32.totalorder 1, %s11
      %p239 = scmp.lt.s32.totalorder %s11, 3
      %p240 = pnand %p238, %p239
      %p241 = pneg %p240
      // Predicated region
      $region48: #{generator_forward.2} parent=5 // pred_check
        _
      $region49: #{generator_forward.2} parent=5 // pred_check_branch
        %243 = sbr.rel (%p240) target = $region51
      $region50: #{generator_forward.2} parent=5 // pred_region
        %s244 = ssub.s32 %s11, 1
        %s245 = sand.u32 %s62, 1
        %s246 = sand.u32 %s62, 1
        %s247 = smul.addr %s246, 128
        %s248 = scalar_lea.vmem [#allocation4], %s247
        // Predicated region
        $region52: #{generator_forward.2} parent=50 // pred_check
          %p249 = pneg %p75
        $region53: #{generator_forward.2} parent=50 // pred_check_branch
          %251 = sbr.rel (%p249) target = $region55
        $region54: #{generator_forward.2} parent=50 // pred_region
          _
        $region55: #{generator_forward.2} parent=50 // pred_fallthru
          _
        %s252 = smul.u32 2, %s20
        %p253 = scmp.lt.s32.totalorder %s252, 1
        %s254 = scalar_select %p253, %s252, 1
        %s255 = smul.addr %s254, 4
        %s256 = scalar_lea.vmem %s0, %s255
        %p257 = pneg %p49
        %p258 = pneg %p46
        %s259 = sand.u32 %s62, 1
        %s260 = sand.u32 %s62, 1
        %s261 = smul.addr %s260, 128
        %s262 = scalar_lea.vmem [#allocation4], %s261
        %p263 = pneg %p75
        %p264 = pneg %p72
        %p265 = pneg %p96
        %p266 = pneg %p93
        %p267 = pneg %p124
        %p268 = pneg %p121
        %s269 = sand.u32 %s111, 1
        %s270 = sand.u32 %s111, 1
        %s271 = smul.addr %s270, 64
        %s272 = scalar_lea.vmem [#allocation5], %s271
        %p273 = pneg %p150
        %p274 = pneg %p147
        %s275 = smul.u32 2, %s20
        %p276 = scmp.lt.s32.totalorder %s275, 1
        %s277 = scalar_select %p276, %s275, 1
        %s278 = smul.addr %s277, 8
        %s279 = scalar_lea.vmem %s4, %s278
        %s280 = smul.u32 2, %s20
        %p281 = scmp.lt.s32.totalorder %s280, 1
        %s282 = scalar_select %p281, %s280, 1
        %s283 = smul.addr %s282, 4
        %s284 = scalar_lea.vmem %s0, %s283
        %s285 = smul.u32 2, %s20
        %s286 = smul.u32 4, %s21
        %s287 = smul.u32 2, %s20
        %s288 = smul.u32 4, %s21
        %s289 = smul.u32 2, %s20
        %p290 = scmp.lt.s32.totalorder %s289, 1
        %s291 = scalar_select %p290, %s289, 1
        %s292 = smul.addr %s291, 8
        %s293 = scalar_lea.vmem %s4, %s292
        %s294 = smul.u32 2, %s20
        %p296 = scmp.eq.s32.totalorder %s21, 0
        // Predicated region
        $region56: #{generator_forward.2} parent=50 // pred_check
          %p297 = pneg %p296
        $region57: #{generator_forward.2} parent=50 // pred_check_branch
          %299 = sbr.rel (%p297) target = $region59
        $region58: #{generator_forward.2} parent=50 // pred_region
          %vm300 = vcmask 7168
          %301 = vst.msk [vmem:[#allocation2] sm:$0xff] %vm300, -inf
          %302 = vst.msk [vmem:[#allocation2 + $0x8] sm:$0xff] %vm300, -inf
          %303 = vst.msk [vmem:[#allocation3] sm:$0xff] %vm300, 0.0
          %304 = vst.msk [vmem:[#allocation3 + $0x8] sm:$0xff] %vm300, 0.0
        $region59: #{generator_forward.2} parent=50 // pred_fallthru
          _
        %s305 = sshra.s32 %s21, 1
        %s306 = sand.u32 %s21, 1
        %s307 = sshra.s32 %s21, 1
        %s308 = sand.u32 %s21, 1
        %s309 = smul.u32 %s305, 4
        %s310 = smul.u32 %s309, 2
        %s311 = sadd.s32 %s310, %s308
        %s312 = scalar_lea.vmem %s2, %s311
        %v313 = vld [vmem:[%s312] ss:$2 sm:$0xf]
        %v314 = vld [vmem:[%s284] sm:$0xf]
        %v315 = vld [vmem:[%s284 + $0x4] sm:$0xf]
        %v316 = vld [vmem:[%s248] sm:$0xff]
        %v317 = vld [vmem:[%s248 + $0x8] sm:$0xff]
        %v318 = vld [vmem:[%s248 + $0x10] sm:$0xff]
        %v319 = vld [vmem:[%s248 + $0x18] sm:$0xff]
        %v320 = vld [vmem:[%s248 + $0x20] sm:$0xff]
        %v321 = vld [vmem:[%s248 + $0x28] sm:$0xff]
        %v322 = vld [vmem:[%s248 + $0x30] sm:$0xff]
        %v323 = vld [vmem:[%s248 + $0x38] sm:$0xff]
        %v324 = vld [vmem:[%s248 + $0x40] sm:$0xff]
        %v325 = vld [vmem:[%s248 + $0x48] sm:$0xff]
        %v326 = vld [vmem:[%s248 + $0x50] sm:$0xff]
        %v327 = vld [vmem:[%s248 + $0x58] sm:$0xff]
        %v328 = vld [vmem:[%s248 + $0x60] sm:$0xff]
        %v329 = vld [vmem:[%s248 + $0x68] sm:$0xff]
        %v330 = vld [vmem:[%s248 + $0x70] sm:$0xff]
        %v331 = vld [vmem:[%s248 + $0x78] sm:$0xff]
        %v333 = vperm.slane %v313, 0
        %v334 = vperm.slane %v313, 1
        %v335 = vperm.slane %v313, 2
        %v336 = vperm.slane %v313, 3
        %v343 = vunpack.c.l.b16 %v314
        %v344 = vunpack.c.l.b16 %v315
        %v345 = vpack.c.b16 %v344, %v343
        %v362 = vunpack.c.l.b16 %v316
        %v363 = vunpack.c.h.b16 %v316
        %v364 = vunpack.c.l.b16 %v317
        %v365 = vunpack.c.h.b16 %v317
        %v366 = vunpack.c.l.b16 %v318
        %v367 = vunpack.c.h.b16 %v318
        %v368 = vunpack.c.l.b16 %v319
        %v369 = vunpack.c.h.b16 %v319
        %v370 = vunpack.c.l.b16 %v320
        %v371 = vunpack.c.h.b16 %v320
        %v372 = vunpack.c.l.b16 %v321
        %v373 = vunpack.c.h.b16 %v321
        %v374 = vunpack.c.l.b16 %v322
        %v375 = vunpack.c.h.b16 %v322
        %v376 = vunpack.c.l.b16 %v323
        %v377 = vunpack.c.h.b16 %v323
        %v378 = vunpack.c.l.b16 %v324
        %v379 = vunpack.c.h.b16 %v324
        %v380 = vunpack.c.l.b16 %v325
        %v381 = vunpack.c.h.b16 %v325
        %v382 = vunpack.c.l.b16 %v326
        %v383 = vunpack.c.h.b16 %v326
        %v384 = vunpack.c.l.b16 %v327
        %v385 = vunpack.c.h.b16 %v327
        %v386 = vunpack.c.l.b16 %v328
        %v387 = vunpack.c.h.b16 %v328
        %v388 = vunpack.c.l.b16 %v329
        %v389 = vunpack.c.h.b16 %v329
        %v390 = vunpack.c.l.b16 %v330
        %v391 = vunpack.c.h.b16 %v330
        %v392 = vunpack.c.l.b16 %v331
        %v393 = vunpack.c.h.b16 %v331
        %v394 = vpack.c.b16 %v366, %v362
        %v395 = vpack.c.b16 %v367, %v363
        %v396 = vpack.c.b16 %v368, %v364
        %v397 = vpack.c.b16 %v369, %v365
        %v398 = vpack.c.b16 %v374, %v370
        %v399 = vpack.c.b16 %v375, %v371
        %v400 = vpack.c.b16 %v376, %v372
        %v401 = vpack.c.b16 %v377, %v373
        %v402 = vpack.c.b16 %v382, %v378
        %v403 = vpack.c.b16 %v383, %v379
        %v404 = vpack.c.b16 %v384, %v380
        %v405 = vpack.c.b16 %v385, %v381
        %v406 = vpack.c.b16 %v390, %v386
        %v407 = vpack.c.b16 %v391, %v387
        %v408 = vpack.c.b16 %v392, %v388
        %v409 = vpack.c.b16 %v393, %v389
        %vm426 = vcmask 523264
        %v428 = vsel %vm426, %v345, 0
        %430 = vmatpush.bf16.msra.mxu0 0
        %431 = vmatpush.bf16.msra.mxu0 0
        %432 = vmatpush.bf16.msra.mxu0 0
        %433 = vmatpush.bf16.msra.mxu0 0
        %434 = vmatpush.bf16.msra.mxu0 %v406
        %435 = vmatpush.bf16.msra.mxu0 %v402
        %436 = vmatpush.bf16.msra.mxu0 %v398
        %437 = vmatpush.bf16.msra.mxu0 %v394
        %438 = vmatmul.bf16.gmra.mxu0 %v428
        %v439 = vpop.f32.mrf.mxu0
        %v440 = vadd.f32 %v333, %v439
        %v441 = vpop.f32.mrf.mxu0
        %v442 = vadd.f32 %v333, %v441
        %443 = vdwg.mxu0
        %444 = vmatpush.bf16.msra.mxu0 0
        %445 = vmatpush.bf16.msra.mxu0 0
        %446 = vmatpush.bf16.msra.mxu0 0
        %447 = vmatpush.bf16.msra.mxu0 0
        %448 = vmatpush.bf16.msra.mxu0 %v407
        %449 = vmatpush.bf16.msra.mxu0 %v403
        %450 = vmatpush.bf16.msra.mxu0 %v399
        %451 = vmatpush.bf16.msra.mxu0 %v395
        %452 = vmatmul.bf16.gmra.mxu0 %v428
        %v453 = vpop.f32.mrf.mxu0
        %v454 = vadd.f32 %v334, %v453
        %v455 = vpop.f32.mrf.mxu0
        %v456 = vadd.f32 %v334, %v455
        %457 = vdwg.mxu0
        %458 = vmatpush.bf16.msra.mxu0 0
        %459 = vmatpush.bf16.msra.mxu0 0
        %460 = vmatpush.bf16.msra.mxu0 0
        %461 = vmatpush.bf16.msra.mxu0 0
        %462 = vmatpush.bf16.msra.mxu0 %v408
        %463 = vmatpush.bf16.msra.mxu0 %v404
        %464 = vmatpush.bf16.msra.mxu0 %v400
        %465 = vmatpush.bf16.msra.mxu0 %v396
        %466 = vmatmul.bf16.gmra.mxu0 %v428
        %v467 = vpop.f32.mrf.mxu0
        %v468 = vadd.f32 %v335, %v467
        %v469 = vpop.f32.mrf.mxu0
        %v470 = vadd.f32 %v335, %v469
        %471 = vdwg.mxu0
        %472 = vmatpush.bf16.msra.mxu0 0
        %473 = vmatpush.bf16.msra.mxu0 0
        %474 = vmatpush.bf16.msra.mxu0 0
        %475 = vmatpush.bf16.msra.mxu0 0
        %476 = vmatpush.bf16.msra.mxu0 %v409
        %477 = vmatpush.bf16.msra.mxu0 %v405
        %478 = vmatpush.bf16.msra.mxu0 %v401
        %479 = vmatpush.bf16.msra.mxu0 %v397
        %480 = vmatmul.bf16.gmra.mxu0 %v428
        %v481 = vpop.f32.mrf.mxu0
        %v482 = vadd.f32 %v336, %v481
        %v483 = vpop.f32.mrf.mxu0
        %v484 = vadd.f32 %v336, %v483
        %485 = vdwg.mxu0
        %v486 = vld [vmem:[#allocation2] sm:$0xff]
        %v487 = vld [vmem:[#allocation2 + $0x8] sm:$0xff]
        %v488 = vmax.f32 %v440, %v468
        %v489 = vmax.f32 %v454, %v482
        %v490 = vmax.f32 %v488, %v489
        %491 = vmax.xlane.f32.xlu0 %v490
        %v492 = vpop.xlane.xlu0 %491
        %v493 = vmax.f32 %v442, %v470
        %v494 = vmax.f32 %v456, %v484
        %v495 = vmax.f32 %v493, %v494
        %496 = vmax.xlane.f32.xlu0 %v495
        %v497 = vpop.xlane.xlu0 %496
        %v498 = vmax.f32 %v486, %v492
        %v499 = vmax.f32 %v487, %v497
        %v500 = vld [vmem:[#allocation3] sm:$0xff]
        %v501 = vld [vmem:[#allocation3 + $0x8] sm:$0xff]
        %v502 = vsub.f32 %v486, %v498
        %v503 = vsub.f32 %v487, %v499
        %v504 = vmul.f32 %v502, 1.442695
        %v505 = vpow.pop %v504
        %v506 = vmul.f32 %v503, 1.442695
        %v507 = vpow.pop %v506
        %v508 = vmul.f32 %v500, %v505
        %v509 = vmul.f32 %v501, %v507
        %511 = vset.pattern.permute.xlu0 0
        %512 = vperm.xlu0 %511, %v498
        %v513 = vpop.permute.xlu0 %512
        %516 = vset.pattern.permute.xlu0 0
        %517 = vperm.xlu0 %516, %v499
        %v518 = vpop.permute.xlu0 %517
        %v520 = vsub.f32 %v440, %v513
        %v521 = vsub.f32 %v454, %v513
        %v522 = vsub.f32 %v468, %v513
        %v523 = vsub.f32 %v482, %v513
        %v524 = vsub.f32 %v442, %v518
        %v525 = vsub.f32 %v456, %v518
        %v526 = vsub.f32 %v470, %v518
        %v527 = vsub.f32 %v484, %v518
        %v528 = vmul.f32 %v520, 1.442695
        %v529 = vpow.pop %v528
        %v530 = vmul.f32 %v521, 1.442695
        %v531 = vpow.pop %v530
        %v532 = vmul.f32 %v522, 1.442695
        %v533 = vpow.pop %v532
        %v534 = vmul.f32 %v523, 1.442695
        %v535 = vpow.pop %v534
        %v536 = vmul.f32 %v524, 1.442695
        %v537 = vpow.pop %v536
        %v538 = vmul.f32 %v525, 1.442695
        %v539 = vpow.pop %v538
        %v540 = vmul.f32 %v526, 1.442695
        %v541 = vpow.pop %v540
        %v542 = vmul.f32 %v527, 1.442695
        %v543 = vpow.pop %v542
        %v544 = vadd.f32 %v529, %v531
        %v545 = vadd.f32 %v544, %v533
        %v546 = vadd.f32 %v545, %v535
        %547 = vadd.xlane.f32.xlu0 %v546
        %v548 = vpop.xlane.xlu0 %547
        %v549 = vadd.f32 %v537, %v539
        %v550 = vadd.f32 %v549, %v541
        %v551 = vadd.f32 %v550, %v543
        %552 = vadd.xlane.f32.xlu0 %v551
        %v553 = vpop.xlane.xlu0 %552
        %v554 = vadd.f32 %v508, %v548
        %v555 = vadd.f32 %v509, %v553
        %vm556 = vcmask 7168
        %557 = vst.msk [vmem:[#allocation3] sm:$0xff] %vm556, %v554
        %558 = vst.msk [vmem:[#allocation3 + $0x8] sm:$0xff] %vm556, %v555
        %559 = vst.msk [vmem:[#allocation2] sm:$0xff] %vm556, %v498
        %560 = vst.msk [vmem:[#allocation2 + $0x8] sm:$0xff] %vm556, %v499
        %561 = vst [vmem:[%s272] sm:$0xff] %v440
        %562 = vst [vmem:[%s272 + $0x8] sm:$0xff] %v454
        %563 = vst [vmem:[%s272 + $0x10] sm:$0xff] %v468
        %564 = vst [vmem:[%s272 + $0x18] sm:$0xff] %v482
        %565 = vst [vmem:[%s272 + $0x20] sm:$0xff] %v442
        %566 = vst [vmem:[%s272 + $0x28] sm:$0xff] %v456
        %567 = vst [vmem:[%s272 + $0x30] sm:$0xff] %v470
        %568 = vst [vmem:[%s272 + $0x38] sm:$0xff] %v484
        %p569 = scmp.eq.s32.totalorder %s21, 1
        // Predicated region
        $region60: #{generator_forward.2} parent=50 // pred_check
          %p570 = pneg %p569
        $region61: #{generator_forward.2} parent=50 // pred_check_branch
          %572 = sbr.rel (%p570) target = $region63
        $region62: #{generator_forward.2} parent=50 // pred_region
          %v573 = vld [vmem:[#allocation2] sm:$0xff]
          %v574 = vld [vmem:[#allocation2 + $0x8] sm:$0xff]
          %v575 = vld [vmem:[#allocation3] sm:$0xff]
          %v576 = vld [vmem:[#allocation3 + $0x8] sm:$0xff]
          %v577 = vlog2.pop %v575
          %v578 = vmul.f32 %v577, 0.6931472
          %v579 = vlog2.pop %v576
          %v580 = vmul.f32 %v579, 0.6931472
          %v581 = vadd.f32 %v573, %v578
          %v582 = vadd.f32 %v574, %v580
          %583 = vst.msk [vmem:[%s293] sm:$0xff] %vm556, %v581
          %584 = vst.msk [vmem:[%s293 + $0x8] sm:$0xff] %vm556, %v582
        $region63: #{generator_forward.2} parent=50 // pred_fallthru
          _
        %s585 = sand.u32 %s111, 1
        %s586 = sand.u32 %s111, 1
        %s587 = smul.addr %s586, 64
        %s588 = scalar_lea.vmem [#allocation5], %s587
        %s589 = smul.u32 2, %s20
        %p590 = scmp.lt.s32.totalorder %s589, 1
        %s591 = scalar_select %p590, %s589, 1
        %s592 = smul.addr %s591, 8
        %s593 = scalar_lea.vmem %s4, %s592
        // Predicated region
        $region64: #{generator_forward.2} parent=50 // pred_check
          %p594 = pneg %p121
        $region65: #{generator_forward.2} parent=50 // pred_check_branch
          %596 = sbr.rel (%p594) target = $region67
        $region66: #{generator_forward.2} parent=50 // pred_region
          %s597 = smul.u32 2, %s20
          %s598 = smul.u32 4, %s21
          %s599 = smul.addr %s597, 8
          %s600 = sadd.s32 %s598, %s599
          %s601 = smul.addr %s600, 8
          %s602 = scalar_lea.vmem %s3, %s601
          // Predicated region
          $region68: #{generator_forward.2} parent=66 // pred_check
            _
          $region69: #{generator_forward.2} parent=66 // pred_check_branch
            %604 = sbr.rel (0) target = $region71
          $region70: #{generator_forward.2} parent=66 // pred_region
            // Predicated region
            $region72: #{generator_forward.2} parent=70 // pred_check
              _
            $region73: #{generator_forward.2} parent=70 // pred_check_branch
              %606 = sbr.rel (0) target = $region75
            $region74: #{generator_forward.2} parent=70 // pred_region
              loop: start=0, step=1, limit=1
              $region76: #{generator_forward.2} parent=74 // loop_pre_header
                _
              $region77: #{generator_forward.2} parent=74 // loop_header
                %s608 = sphi 0, %s612
                %p609 = scmp.ge.s32.totalorder %s608, 1
                %s613 = sphi %s588, %s588
                %s614 = sphi %s602, %s602
              $region78: #{generator_forward.2} parent=74 // loop_header_branch
                %611 = sbr.rel (%p609) target = $region82
              $region79: #{generator_forward.2} parent=74 // loop_body
                %v615 = vld [vmem:[%s613] sm:$0xff]
                %616 = vst [vmem:[%s614] sm:$0xff] %v615
                %v617 = vld [vmem:[%s613 + $0x8] sm:$0xff]
                %618 = vst [vmem:[%s614 + $0x8] sm:$0xff] %v617
                %v619 = vld [vmem:[%s613 + $0x10] sm:$0xff]
                %620 = vst [vmem:[%s614 + $0x10] sm:$0xff] %v619
                %v621 = vld [vmem:[%s613 + $0x18] sm:$0xff]
                %622 = vst [vmem:[%s614 + $0x18] sm:$0xff] %v621
                %v623 = vld [vmem:[%s613 + $0x20] sm:$0xff]
                %624 = vst [vmem:[%s614 + $0x40] sm:$0xff] %v623
                %v625 = vld [vmem:[%s613 + $0x28] sm:$0xff]
                %626 = vst [vmem:[%s614 + $0x48] sm:$0xff] %v625
                %v627 = vld [vmem:[%s613 + $0x30] sm:$0xff]
                %628 = vst [vmem:[%s614 + $0x50] sm:$0xff] %v627
                %v629 = vld [vmem:[%s613 + $0x38] sm:$0xff]
                %630 = vst [vmem:[%s614 + $0x58] sm:$0xff] %v629
              $region80: #{generator_forward.2} parent=74 // loop_footer
                %s612 = sadd.s32 1, %s608
              $region81: #{generator_forward.2} parent=74 // loop_footer_branch
                %607 = sbr.rel target = $region77
              $region82: #{generator_forward.2} parent=74 // loop_exit
                _
            $region75: #{generator_forward.2} parent=70 // pred_fallthru
              _
            // Predicated region
            $region83: #{generator_forward.2} parent=70 // pred_check
              _
            $region84: #{generator_forward.2} parent=70 // pred_check_branch
              %632 = sbr.rel target = $region86
            $region85: #{generator_forward.2} parent=70 // pred_region
              _
            $region86: #{generator_forward.2} parent=70 // pred_fallthru
              _
          $region71: #{generator_forward.2} parent=66 // pred_fallthru
            _
          %633 = vnop
        $region67: #{generator_forward.2} parent=50 // pred_fallthru
          _
        // Predicated region
        $region87: #{generator_forward.2} parent=50 // pred_check
          %p634 = pneg %p147
        $region88: #{generator_forward.2} parent=50 // pred_check_branch
          %636 = sbr.rel (%p634) target = $region90
        $region89: #{generator_forward.2} parent=50 // pred_region
          %s637 = smul.u32 2, %s20
        $region90: #{generator_forward.2} parent=50 // pred_fallthru
          _
        // Predicated region
        $region91: #{generator_forward.2} parent=50 // pred_check
          %p638 = pneg %p147
        $region92: #{generator_forward.2} parent=50 // pred_check_branch
          %640 = sbr.rel (%p638) target = $region94
        $region93: #{generator_forward.2} parent=50 // pred_region
          %s641 = smul.u32 2, %s20
          %p642 = scmp.lt.s32.totalorder %s641, 1
          %s643 = scalar_select %p642, %s641, 1
          %s644 = smul.addr %s643, 8
          %s645 = scalar_lea.vmem %s4, %s644
        $region94: #{generator_forward.2} parent=50 // pred_fallthru
          _
      $region51: #{generator_forward.2} parent=5 // pred_fallthru
        _
      %p646 = scmp.le.s32.totalorder 2, %s11
      // Predicated region
      $region95: #{generator_forward.2} parent=5 // pred_check
        %p647 = pneg %p646
      $region96: #{generator_forward.2} parent=5 // pred_check_branch
        %649 = sbr.rel (%p647) target = $region98
      $region97: #{generator_forward.2} parent=5 // pred_region
        %s650 = ssub.s32 %s11, 2
        // Predicated region
        $region99: #{generator_forward.2} parent=97 // pred_check
          %p651 = pneg %p127
        $region100: #{generator_forward.2} parent=97 // pred_check_branch
          %653 = sbr.rel (%p651) target = $region102
        $region101: #{generator_forward.2} parent=97 // pred_region
          %s654 = sand.u32 %s112, 1
          %s655 = sand.u32 %s112, 1
          %s656 = smul.addr %s655, 64
          %s657 = scalar_lea.vmem [#allocation5], %s656
        $region102: #{generator_forward.2} parent=97 // pred_fallthru
          _
      $region98: #{generator_forward.2} parent=5 // pred_fallthru
        _
    $region6: #{generator_forward.2} parent=1 // loop_footer
      %s15 = sadd.s32 1, %s11
    $region7: #{generator_forward.2} parent=1 // loop_footer_branch
      %10 = sbr.rel target = $region3
    $region8: #{generator_forward.2} parent=1 // loop_exit
      _

</llo_original>
